<compile_context>
chip_gen: v5e
topology: v5e:2x2
jax: 0.10.0
libtpu: 0.0.40
codegen_flags: <defaults>
</compile_context>

<pallas_src>
import functools

import jax
import jax.numpy as jnp
from jax import lax
from jax.experimental import pallas as pl
from jax.experimental.pallas import tpu as pltpu


# ------------------------------ Pallas kernel --------------------------------

def _skip02_kernel(x_ref, w1_ref, b1_ref, w2_ref, b2_ref, w3_ref, b3_ref,
                   o_ref, colx_s, cola_s, *, H, bpb, WCi, WCo):
    """Fused SkipConnection02 forward for `bpb` batch elements stacked into M.

    x_ref  : (bpb*H, W*Cin)          lane-dense input rows (channels fastest)
    w1_ref : (3*W*Cin, 2*W*Cout)     conv1 dy-taps stacked along K; residual 1x1
                                     fused along N (cols [WCo:2*WCo], active only
                                     on the unshifted K block)
    b1_ref : (1, 2*W*Cout)           [conv1 bias | residual bias] (BN folded)
    w2_ref : (3*W*Cout, W*Cout)      conv2 dy-taps stacked along K
    w3_ref : (3*W*Cout, W*Cout)      dilated conv3 dy-taps stacked along K
    o_ref  : (bpb*H, W*Cout)         lane-dense output rows
    colx_s : (bpb*H, 3*W*Cin)  VMEM  row-im2col operand for conv1
    cola_s : (bpb*H, 3*W*Cout) VMEM  row-im2col operand, reused for conv2/conv3
    """

    def im2col(dst_s, src, WC, d):
        # Column blocks: [0:WC]   = rows shifted by -d (dy=0)
        #                [WC:2WC] = unshifted rows     (dy=1)
        #                [2WC:3WC]= rows shifted by +d (dy=2)
        # Vertical zero padding: only the d halo rows per batch segment are
        # zeroed (top of block 0, bottom of block 2); everything else is
        # overwritten, so there is no full-buffer memset per grid step.
        dst_s[:, WC:2 * WC] = src
        for b in range(bpb):                      # static unroll, bpb is tiny
            r = b * H
            dst_s[r:r + d, 0:WC] = jnp.zeros((d, WC), jnp.float32)
            dst_s[r + d:r + H, 0:WC] = src[r:r + H - d, :]
            dst_s[r:r + H - d, 2 * WC:3 * WC] = src[r + d:r + H, :]
            dst_s[r + H - d:r + H, 2 * WC:3 * WC] = jnp.zeros((d, WC), jnp.float32)

    x = x_ref[...]                                              # (M, WCi)

    # conv1 (3x3, pad=1) + folded BN + ReLU, with the residual 1x1+BN+ReLU
    # branch fused along N: a single (M, 3*WCi) x (3*WCi, 2*WCo) MXU matmul.
    im2col(colx_s, x, WCi, 1)
    y1 = jnp.maximum(
        jnp.dot(colx_s[...], w1_ref[...], preferred_element_type=jnp.float32)
        + b1_ref[...], 0.0)                                     # (M, 2*WCo)
    a1 = y1[:, :WCo]          # conv1 activation        (lane-aligned split)
    res = y1[:, WCo:]         # residual-branch activation

    # conv2 (3x3, pad=1): one K = 3*WCo matmul.
    im2col(cola_s, a1, WCo, 1)
    a2 = jnp.maximum(
        jnp.dot(cola_s[...], w2_ref[...], preferred_element_type=jnp.float32)
        + b2_ref[...], 0.0)

    # conv3 (3x3, pad=2, dilation=2): one K = 3*WCo matmul.
    im2col(cola_s, a2, WCo, 2)
    a3 = jnp.maximum(
        jnp.dot(cola_s[...], w3_ref[...], preferred_element_type=jnp.float32)
        + b3_ref[...], 0.0)

    o_ref[...] = a3 + res                                       # (M, 128) lane-dense


# ------------------------------ weight preparation ---------------------------

def _banded_rows(w_hwio, W, pad, dil):
    """Per-dy banded matrices (W*Cin, W*Cout) folding the horizontal (dx) taps
    and horizontal zero padding of a 3x3 conv:
        banded[dy][w'*Cin + c, w*Cout + o] = w[dy, dx, c, o],  w' = w + dx*dil - pad
    (out-of-range w' entries stay zero, which implements horizontal padding)."""
    _, _, cin, cout = w_hwio.shape
    mats = []
    for dy in range(3):
        m = jnp.zeros((W * cin, W * cout), jnp.float32)
        for dx in range(3):
            shift = dx * dil - pad
            sel = jnp.eye(W, W, k=-shift, dtype=jnp.float32)    # sel[w+shift, w] = 1
            m = m + jnp.kron(sel, w_hwio[dy, dx])
        mats.append(m)
    return mats


def prepare_weights(params, W):
    """One-time (per parameter set) weight preparation, done OUTSIDE the jitted
    forward so repeated forwards never rebuild the banded matrices."""
    (w1, b1), (w2, b2), (w3, b3), (wr, br) = params
    cin, cout = w1.shape[2], w1.shape[3]
    WCi, WCo = W * cin, W * cout

    # conv1: dy taps stacked along K; residual 1x1 fused along N (active only on
    # the unshifted K block), so one matmul yields [conv1 | residual].
    w1k = jnp.concatenate(_banded_rows(w1, W, pad=1, dil=1), axis=0)     # (3*WCi, WCo)
    wrb = jnp.kron(jnp.eye(W, dtype=jnp.float32), wr[0, 0])              # (WCi, WCo)
    rcol = jnp.concatenate(
        [jnp.zeros((WCi, WCo), jnp.float32), wrb,
         jnp.zeros((WCi, WCo), jnp.float32)], axis=0)                    # (3*WCi, WCo)
    w1f = jnp.concatenate([w1k, rcol], axis=1)                           # (3*WCi, 2*WCo)
    b1f = jnp.concatenate([jnp.tile(b1, W), jnp.tile(br, W)]).reshape(1, 2 * WCo)

    # conv2 / dilated conv3: dy taps stacked along K -> one matmul each.
    w2f = jnp.concatenate(_banded_rows(w2, W, pad=1, dil=1), axis=0)     # (3*WCo, WCo)
    b2f = jnp.tile(b2, W).reshape(1, WCo)
    w3f = jnp.concatenate(_banded_rows(w3, W, pad=2, dil=2), axis=0)     # (3*WCo, WCo)
    b3f = jnp.tile(b3, W).reshape(1, WCo)

    return (w1f, b1f, w2f, b2f, w3f, b3f)


def _batch_per_block(B):
    """Batch elements per grid step.  Single-TC chips (v5e/v6e): fold the whole
    batch into M (one grid step, larger matmuls).  v7x (2 TensorCores): split the
    batch across cores via the 'parallel' grid axis."""
    try:
        kind = jax.devices()[0].device_kind.lower()
    except Exception:
        kind = ""
    if "v7" in kind and B % 2 == 0 and B >= 2:
        return B // 2
    return B


# ------------------------------ forward wrapper -------------------------------

@jax.jit
def skip_connection02_forward(x_nchw, packed):
    """x_nchw: (B, Cin, H, W) float32 (PyTorch layout); packed: prepare_weights()."""
    w1f, b1f, w2f, b2f, w3f, b3f = packed
    B, Cin, H, W = x_nchw.shape
    WCi = W * Cin
    WCo = w2f.shape[1]
    Cout = WCo // W

    # NCHW -> lane-dense (B*H, W*Cin) rows (channels fastest on the lane axis).
    x2d = jnp.transpose(x_nchw, (0, 2, 3, 1)).astype(jnp.float32).reshape(B * H, WCi)

    bpb = _batch_per_block(B)          # trace-time constant
    M = bpb * H
    grid = (B // bpb,)

    kernel = functools.partial(_skip02_kernel, H=H, bpb=bpb, WCi=WCi, WCo=WCo)

    out2d = pl.pallas_call(
        kernel,
        out_shape=jax.ShapeDtypeStruct((B * H, WCo), jnp.float32),
        grid=grid,
        in_specs=[
            pl.BlockSpec((M, WCi), lambda i: (i, 0)),
            pl.BlockSpec((3 * WCi, 2 * WCo), lambda i: (0, 0)),
            pl.BlockSpec((1, 2 * WCo), lambda i: (0, 0)),
            pl.BlockSpec((3 * WCo, WCo), lambda i: (0, 0)),
            pl.BlockSpec((1, WCo), lambda i: (0, 0)),
            pl.BlockSpec((3 * WCo, WCo), lambda i: (0, 0)),
            pl.BlockSpec((1, WCo), lambda i: (0, 0)),
        ],
        out_specs=pl.BlockSpec((M, WCo), lambda i: (i, 0)),
        scratch_shapes=[
            pltpu.VMEM((M, 3 * WCi), jnp.float32),   # conv1 row-im2col operand
            pltpu.VMEM((M, 3 * WCo), jnp.float32),   # conv2/conv3 row-im2col operand
        ],
        compiler_params=pltpu.CompilerParams(dimension_semantics=("parallel",)),
    )(x2d, w1f, b1f, w2f, b2f, w3f, b3f)

    out = out2d.reshape(B, H, W, Cout)
    return jnp.transpose(out, (0, 3, 1, 2))          # back to NCHW


# ------------------------------ parameter setup (glue) ------------------------

def _fold_bn(w_hwio, conv_b, gamma, beta, mean, var, eps=1e-5):
    scale = gamma / jnp.sqrt(var + eps)              # (Cout,)
    w_f = w_hwio * scale                             # broadcast over last (O) dim
    b_f = (conv_b - mean) * scale + beta
    return w_f.astype(jnp.float32), b_f.astype(jnp.float32)


def make_conv_bn_params(key, cin, cout, k):
    """Deterministic Conv2d(k x k) + BatchNorm2d parameters, BN folded in."""
    k1, k2, k3, k4, k5, k6 = jax.random.split(key, 6)
    fan_in = cin * k * k
    bound = 1.0 / (fan_in ** 0.5)
    w = jax.random.uniform(k1, (k, k, cin, cout), jnp.float32, -bound, bound)  # HWIO
    b = jax.random.uniform(k2, (cout,), jnp.float32, -bound, bound)
    gamma = jax.random.uniform(k3, (cout,), jnp.float32, 0.5, 1.5)
    beta = jax.random.uniform(k4, (cout,), jnp.float32, -0.2, 0.2)
    mean = 0.1 * jax.random.normal(k5, (cout,), jnp.float32)
    var = jax.random.uniform(k6, (cout,), jnp.float32, 0.5, 1.5)
    return _fold_bn(w, b, gamma, beta, mean, var)


# ------------------------------ pure-JAX reference ----------------------------

def reference_forward(x_nchw, params):
    (w1, b1), (w2, b2), (w3, b3), (wr, br) = params
    x = jnp.transpose(x_nchw, (0, 2, 3, 1)).astype(jnp.float32)

    def cbr(inp, w, b, pad, dil):
        y = lax.conv_general_dilated(
            inp, w, window_strides=(1, 1), padding=[(pad, pad), (pad, pad)],
            rhs_dilation=(dil, dil), dimension_numbers=('NHWC', 'HWIO', 'NHWC'))
        return jnp.maximum(y + b, 0.0)

    a = cbr(x, w1, b1, 1, 1)
    a = cbr(a, w2, b2, 1, 1)
    a = cbr(a, w3, b3, 2, 2)
    r = cbr(x, wr, br, 0, 1)
    return jnp.transpose(a + r, (0, 3, 1, 2))


# ------------------------------ main -------------------------------------------

if __name__ == "__main__":
    key = jax.random.PRNGKey(0)
    k_x, k1, k2, k3, kr = jax.random.split(key, 5)

    B, Cin, Cout, H, W = 2, 4, 8, 16, 16
    x = jax.random.normal(k_x, (B, Cin, H, W), jnp.float32)    # NCHW like PyTorch

    params = (
        make_conv_bn_params(k1, Cin, Cout, 3),   # conv_3_3_2[0] + BN
        make_conv_bn_params(k2, Cout, Cout, 3),  # conv_3_3_2[3] + BN
        make_conv_bn_params(k3, Cout, Cout, 3),  # conv_3_3_2[6] (dilated) + BN
        make_conv_bn_params(kr, Cin, Cout, 1),   # res_connection02 1x1 + BN
    )

    packed = prepare_weights(params, W)          # one-time weight prep (not per call)
    packed = jax.tree_util.tree_map(jax.block_until_ready, packed)

    out = skip_connection02_forward(x, packed)
    out = jax.block_until_ready(out)

    ref = reference_forward(x, params)
    assert out.shape == (B, Cout, H, W), out.shape
    assert jnp.allclose(out, ref, atol=1e-4, rtol=1e-4), \
        f"max abs err {jnp.max(jnp.abs(out - ref))}"

    print("KERNEL_OK")
</pallas_src>

<mosaic_0001>
module attributes {stable_mosaic.version = 11 : i64} {
  func.func @_skip02_kernel(%arg0: i32, %arg1: memref<32x64xf32, #tpu.memory_space<vmem>>, %arg2: memref<192x256xf32, #tpu.memory_space<vmem>>, %arg3: memref<1x256xf32, #tpu.memory_space<vmem>>, %arg4: memref<384x128xf32, #tpu.memory_space<vmem>>, %arg5: memref<1x128xf32, #tpu.memory_space<vmem>>, %arg6: memref<384x128xf32, #tpu.memory_space<vmem>>, %arg7: memref<1x128xf32, #tpu.memory_space<vmem>>, %arg8: memref<32x128xf32, #tpu.memory_space<vmem>>, %arg9: memref<32x192xf32, #tpu.memory_space<vmem>>, %arg10: memref<32x384xf32, #tpu.memory_space<vmem>>) attributes {dimension_semantics = [#tpu.dimension_semantics<parallel>], iteration_bounds = array<i64: 1>, scalar_prefetch = 0 : i64, scratch_operands = 2 : i64, tpu.core_type = #tpu.core_type<tc>, window_params = [{transform_indices = @transform_0, window_bounds = array<i64: 32, 64>}, {pipeline_mode = #tpu.pipeline_mode<synchronous>, transform_indices = @transform_1, window_bounds = array<i64: 192, 256>}, {pipeline_mode = #tpu.pipeline_mode<synchronous>, transform_indices = @transform_2, window_bounds = array<i64: 1, 256>}, {pipeline_mode = #tpu.pipeline_mode<synchronous>, transform_indices = @transform_3, window_bounds = array<i64: 384, 128>}, {pipeline_mode = #tpu.pipeline_mode<synchronous>, transform_indices = @transform_4, window_bounds = array<i64: 1, 128>}, {pipeline_mode = #tpu.pipeline_mode<synchronous>, transform_indices = @transform_5, window_bounds = array<i64: 384, 128>}, {pipeline_mode = #tpu.pipeline_mode<synchronous>, transform_indices = @transform_6, window_bounds = array<i64: 1, 128>}, {transform_indices = @transform_7, window_bounds = array<i64: 32, 128>}]} {
    %c0 = arith.constant 0 : index
    %c0_0 = arith.constant 0 : index
    %0 = vector.load %arg1[%c0, %c0_0] : memref<32x64xf32, #tpu.memory_space<vmem>>, vector<32x64xf32>
    %c0_1 = arith.constant 0 : index
    %c64 = arith.constant 64 : index
    %1 = vector.load %arg9[%c0_1, %c64] : memref<32x192xf32, #tpu.memory_space<vmem>>, vector<32x64xf32>
    tpu.vector_store %arg9[%c0_1, %c64], %0 {strides = array<i32>} : memref<32x192xf32, #tpu.memory_space<vmem>>, vector<32x64xf32>,
    %cst = arith.constant 0.000000e+00 : f32
    %2 = vector.broadcast %cst : f32 to vector<1x64xf32>
    %c0_2 = arith.constant 0 : index
    %c0_3 = arith.constant 0 : index
    %3 = vector.load %arg9[%c0_2, %c0_3] : memref<32x192xf32, #tpu.memory_space<vmem>>, vector<1x64xf32>
    tpu.vector_store %arg9[%c0_2, %c0_3], %2 {strides = array<i32>} : memref<32x192xf32, #tpu.memory_space<vmem>>, vector<1x64xf32>,
    %4 = vector.extract_strided_slice %0 {offsets = [0, 0], sizes = [15, 64], strides = [1, 1]} : vector<32x64xf32> to vector<15x64xf32>
    %c1 = arith.constant 1 : index
    %c0_4 = arith.constant 0 : index
    %5 = vector.load %arg9[%c1, %c0_4] : memref<32x192xf32, #tpu.memory_space<vmem>>, vector<15x64xf32>
    tpu.vector_store %arg9[%c1, %c0_4], %4 {strides = array<i32>} : memref<32x192xf32, #tpu.memory_space<vmem>>, vector<15x64xf32>,
    %6 = vector.extract_strided_slice %0 {offsets = [1, 0], sizes = [15, 64], strides = [1, 1]} : vector<32x64xf32> to vector<15x64xf32>
    %c0_5 = arith.constant 0 : index
    %c128 = arith.constant 128 : index
    %7 = vector.load %arg9[%c0_5, %c128] : memref<32x192xf32, #tpu.memory_space<vmem>>, vector<15x64xf32>
    tpu.vector_store %arg9[%c0_5, %c128], %6 {strides = array<i32>} : memref<32x192xf32, #tpu.memory_space<vmem>>, vector<15x64xf32>,
    %cst_6 = arith.constant 0.000000e+00 : f32
    %8 = vector.broadcast %cst_6 : f32 to vector<1x64xf32>
    %c15 = arith.constant 15 : index
    %c128_7 = arith.constant 128 : index
    %9 = vector.load %arg9[%c15, %c128_7] : memref<32x192xf32, #tpu.memory_space<vmem>>, vector<1x64xf32>
    tpu.vector_store %arg9[%c15, %c128_7], %8 {strides = array<i32>} : memref<32x192xf32, #tpu.memory_space<vmem>>, vector<1x64xf32>,
    %cst_8 = arith.constant 0.000000e+00 : f32
    %10 = vector.broadcast %cst_8 : f32 to vector<1x64xf32>
    %c16 = arith.constant 16 : index
    %c0_9 = arith.constant 0 : index
    %11 = vector.load %arg9[%c16, %c0_9] : memref<32x192xf32, #tpu.memory_space<vmem>>, vector<1x64xf32>
    tpu.vector_store %arg9[%c16, %c0_9], %10 {strides = array<i32>} : memref<32x192xf32, #tpu.memory_space<vmem>>, vector<1x64xf32>,
    %12 = vector.extract_strided_slice %0 {offsets = [16, 0], sizes = [15, 64], strides = [1, 1]} : vector<32x64xf32> to vector<15x64xf32>
    %c17 = arith.constant 17 : index
    %c0_10 = arith.constant 0 : index
    %13 = vector.load %arg9[%c17, %c0_10] : memref<32x192xf32, #tpu.memory_space<vmem>>, vector<15x64xf32>
    tpu.vector_store %arg9[%c17, %c0_10], %12 {strides = array<i32>} : memref<32x192xf32, #tpu.memory_space<vmem>>, vector<15x64xf32>,
    %14 = vector.extract_strided_slice %0 {offsets = [17, 0], sizes = [15, 64], strides = [1, 1]} : vector<32x64xf32> to vector<15x64xf32>
    %c16_11 = arith.constant 16 : index
    %c128_12 = arith.constant 128 : index
    %15 = vector.load %arg9[%c16_11, %c128_12] : memref<32x192xf32, #tpu.memory_space<vmem>>, vector<15x64xf32>
    tpu.vector_store %arg9[%c16_11, %c128_12], %14 {strides = array<i32>} : memref<32x192xf32, #tpu.memory_space<vmem>>, vector<15x64xf32>,
    %cst_13 = arith.constant 0.000000e+00 : f32
    %16 = vector.broadcast %cst_13 : f32 to vector<1x64xf32>
    %c31 = arith.constant 31 : index
    %c128_14 = arith.constant 128 : index
    %17 = vector.load %arg9[%c31, %c128_14] : memref<32x192xf32, #tpu.memory_space<vmem>>, vector<1x64xf32>
    tpu.vector_store %arg9[%c31, %c128_14], %16 {strides = array<i32>} : memref<32x192xf32, #tpu.memory_space<vmem>>, vector<1x64xf32>,
    %c0_15 = arith.constant 0 : index
    %c0_16 = arith.constant 0 : index
    %18 = vector.load %arg9[%c0_15, %c0_16] : memref<32x192xf32, #tpu.memory_space<vmem>>, vector<32x192xf32>
    %c0_17 = arith.constant 0 : index
    %c0_18 = arith.constant 0 : index
    %19 = vector.load %arg2[%c0_17, %c0_18] : memref<192x256xf32, #tpu.memory_space<vmem>>, vector<192x256xf32>
    %cst_19 = arith.constant dense<0.000000e+00> : vector<32x256xf32>
    %20 = tpu.matmul %18, %19, %cst_19 {dimension_numbers = #tpu.dot_dimension_numbers<[1], [0], [0], [1], [0, 0, 1, 1], [], []>} : vector<32x192xf32>, vector<192x256xf32>, vector<32x256xf32> -> vector<32x256xf32>
    %c0_20 = arith.constant 0 : index
    %c0_21 = arith.constant 0 : index
    %21 = vector.load %arg3[%c0_20, %c0_21] : memref<1x256xf32, #tpu.memory_space<vmem>>, vector<1x256xf32>
    %22 = vector.broadcast %21 : vector<1x256xf32> to vector<32x256xf32>
    %23 = arith.addf %20, %22 : vector<32x256xf32>
    %cst_22 = arith.constant 0.000000e+00 : f32
    %24 = vector.broadcast %cst_22 : f32 to vector<32x256xf32>
    %25 = arith.maximumf %23, %24 : vector<32x256xf32>
    %26 = vector.extract_strided_slice %25 {offsets = [0, 0], sizes = [32, 128], strides = [1, 1]} : vector<32x256xf32> to vector<32x128xf32>
    %27 = vector.extract_strided_slice %25 {offsets = [0, 128], sizes = [32, 128], strides = [1, 1]} : vector<32x256xf32> to vector<32x128xf32>
    %c0_23 = arith.constant 0 : index
    %c128_24 = arith.constant 128 : index
    %28 = vector.load %arg10[%c0_23, %c128_24] : memref<32x384xf32, #tpu.memory_space<vmem>>, vector<32x128xf32>
    tpu.vector_store %arg10[%c0_23, %c128_24], %26 {strides = array<i32>} : memref<32x384xf32, #tpu.memory_space<vmem>>, vector<32x128xf32>,
    %cst_25 = arith.constant 0.000000e+00 : f32
    %29 = vector.broadcast %cst_25 : f32 to vector<1x128xf32>
    %c0_26 = arith.constant 0 : index
    %c0_27 = arith.constant 0 : index
    %30 = vector.load %arg10[%c0_26, %c0_27] : memref<32x384xf32, #tpu.memory_space<vmem>>, vector<1x128xf32>
    tpu.vector_store %arg10[%c0_26, %c0_27], %29 {strides = array<i32>} : memref<32x384xf32, #tpu.memory_space<vmem>>, vector<1x128xf32>,
    %31 = vector.extract_strided_slice %26 {offsets = [0, 0], sizes = [15, 128], strides = [1, 1]} : vector<32x128xf32> to vector<15x128xf32>
    %c1_28 = arith.constant 1 : index
    %c0_29 = arith.constant 0 : index
    %32 = vector.load %arg10[%c1_28, %c0_29] : memref<32x384xf32, #tpu.memory_space<vmem>>, vector<15x128xf32>
    tpu.vector_store %arg10[%c1_28, %c0_29], %31 {strides = array<i32>} : memref<32x384xf32, #tpu.memory_space<vmem>>, vector<15x128xf32>,
    %33 = vector.extract_strided_slice %26 {offsets = [1, 0], sizes = [15, 128], strides = [1, 1]} : vector<32x128xf32> to vector<15x128xf32>
    %c0_30 = arith.constant 0 : index
    %c256 = arith.constant 256 : index
    %34 = vector.load %arg10[%c0_30, %c256] : memref<32x384xf32, #tpu.memory_space<vmem>>, vector<15x128xf32>
    tpu.vector_store %arg10[%c0_30, %c256], %33 {strides = array<i32>} : memref<32x384xf32, #tpu.memory_space<vmem>>, vector<15x128xf32>,
    %cst_31 = arith.constant 0.000000e+00 : f32
    %35 = vector.broadcast %cst_31 : f32 to vector<1x128xf32>
    %c15_32 = arith.constant 15 : index
    %c256_33 = arith.constant 256 : index
    %36 = vector.load %arg10[%c15_32, %c256_33] : memref<32x384xf32, #tpu.memory_space<vmem>>, vector<1x128xf32>
    tpu.vector_store %arg10[%c15_32, %c256_33], %35 {strides = array<i32>} : memref<32x384xf32, #tpu.memory_space<vmem>>, vector<1x128xf32>,
    %cst_34 = arith.constant 0.000000e+00 : f32
    %37 = vector.broadcast %cst_34 : f32 to vector<1x128xf32>
    %c16_35 = arith.constant 16 : index
    %c0_36 = arith.constant 0 : index
    %38 = vector.load %arg10[%c16_35, %c0_36] : memref<32x384xf32, #tpu.memory_space<vmem>>, vector<1x128xf32>
    tpu.vector_store %arg10[%c16_35, %c0_36], %37 {strides = array<i32>} : memref<32x384xf32, #tpu.memory_space<vmem>>, vector<1x128xf32>,
    %39 = vector.extract_strided_slice %26 {offsets = [16, 0], sizes = [15, 128], strides = [1, 1]} : vector<32x128xf32> to vector<15x128xf32>
    %c17_37 = arith.constant 17 : index
    %c0_38 = arith.constant 0 : index
    %40 = vector.load %arg10[%c17_37, %c0_38] : memref<32x384xf32, #tpu.memory_space<vmem>>, vector<15x128xf32>
    tpu.vector_store %arg10[%c17_37, %c0_38], %39 {strides = array<i32>} : memref<32x384xf32, #tpu.memory_space<vmem>>, vector<15x128xf32>,
    %41 = vector.extract_strided_slice %26 {offsets = [17, 0], sizes = [15, 128], strides = [1, 1]} : vector<32x128xf32> to vector<15x128xf32>
    %c16_39 = arith.constant 16 : index
    %c256_40 = arith.constant 256 : index
    %42 = vector.load %arg10[%c16_39, %c256_40] : memref<32x384xf32, #tpu.memory_space<vmem>>, vector<15x128xf32>
    tpu.vector_store %arg10[%c16_39, %c256_40], %41 {strides = array<i32>} : memref<32x384xf32, #tpu.memory_space<vmem>>, vector<15x128xf32>,
    %cst_41 = arith.constant 0.000000e+00 : f32
    %43 = vector.broadcast %cst_41 : f32 to vector<1x128xf32>
    %c31_42 = arith.constant 31 : index
    %c256_43 = arith.constant 256 : index
    %44 = vector.load %arg10[%c31_42, %c256_43] : memref<32x384xf32, #tpu.memory_space<vmem>>, vector<1x128xf32>
    tpu.vector_store %arg10[%c31_42, %c256_43], %43 {strides = array<i32>} : memref<32x384xf32, #tpu.memory_space<vmem>>, vector<1x128xf32>,
    %c0_44 = arith.constant 0 : index
    %c0_45 = arith.constant 0 : index
    %45 = vector.load %arg10[%c0_44, %c0_45] : memref<32x384xf32, #tpu.memory_space<vmem>>, vector<32x384xf32>
    %c0_46 = arith.constant 0 : index
    %c0_47 = arith.constant 0 : index
    %46 = vector.load %arg4[%c0_46, %c0_47] : memref<384x128xf32, #tpu.memory_space<vmem>>, vector<384x128xf32>
    %cst_48 = arith.constant dense<0.000000e+00> : vector<32x128xf32>
    %47 = tpu.matmul %45, %46, %cst_48 {dimension_numbers = #tpu.dot_dimension_numbers<[1], [0], [0], [1], [0, 0, 1, 1], [], []>} : vector<32x384xf32>, vector<384x128xf32>, vector<32x128xf32> -> vector<32x128xf32>
    %c0_49 = arith.constant 0 : index
    %c0_50 = arith.constant 0 : index
    %48 = vector.load %arg5[%c0_49, %c0_50] : memref<1x128xf32, #tpu.memory_space<vmem>>, vector<1x128xf32>
    %49 = vector.broadcast %48 : vector<1x128xf32> to vector<32x128xf32>
    %50 = arith.addf %47, %49 : vector<32x128xf32>
    %cst_51 = arith.constant 0.000000e+00 : f32
    %51 = vector.broadcast %cst_51 : f32 to vector<32x128xf32>
    %52 = arith.maximumf %50, %51 : vector<32x128xf32>
    %c0_52 = arith.constant 0 : index
    %c128_53 = arith.constant 128 : index
    %53 = vector.load %arg10[%c0_52, %c128_53] : memref<32x384xf32, #tpu.memory_space<vmem>>, vector<32x128xf32>
    tpu.vector_store %arg10[%c0_52, %c128_53], %52 {strides = array<i32>} : memref<32x384xf32, #tpu.memory_space<vmem>>, vector<32x128xf32>,
    %cst_54 = arith.constant 0.000000e+00 : f32
    %54 = vector.broadcast %cst_54 : f32 to vector<2x128xf32>
    %c0_55 = arith.constant 0 : index
    %c0_56 = arith.constant 0 : index
    %55 = vector.load %arg10[%c0_55, %c0_56] : memref<32x384xf32, #tpu.memory_space<vmem>>, vector<2x128xf32>
    tpu.vector_store %arg10[%c0_55, %c0_56], %54 {strides = array<i32>} : memref<32x384xf32, #tpu.memory_space<vmem>>, vector<2x128xf32>,
    %56 = vector.extract_strided_slice %52 {offsets = [0, 0], sizes = [14, 128], strides = [1, 1]} : vector<32x128xf32> to vector<14x128xf32>
    %c2 = arith.constant 2 : index
    %c0_57 = arith.constant 0 : index
    %57 = vector.load %arg10[%c2, %c0_57] : memref<32x384xf32, #tpu.memory_space<vmem>>, vector<14x128xf32>
    tpu.vector_store %arg10[%c2, %c0_57], %56 {strides = array<i32>} : memref<32x384xf32, #tpu.memory_space<vmem>>, vector<14x128xf32>,
    %58 = vector.extract_strided_slice %52 {offsets = [2, 0], sizes = [14, 128], strides = [1, 1]} : vector<32x128xf32> to vector<14x128xf32>
    %c0_58 = arith.constant 0 : index
    %c256_59 = arith.constant 256 : index
    %59 = vector.load %arg10[%c0_58, %c256_59] : memref<32x384xf32, #tpu.memory_space<vmem>>, vector<14x128xf32>
    tpu.vector_store %arg10[%c0_58, %c256_59], %58 {strides = array<i32>} : memref<32x384xf32, #tpu.memory_space<vmem>>, vector<14x128xf32>,
    %cst_60 = arith.constant 0.000000e+00 : f32
    %60 = vector.broadcast %cst_60 : f32 to vector<2x128xf32>
    %c14 = arith.constant 14 : index
    %c256_61 = arith.constant 256 : index
    %61 = vector.load %arg10[%c14, %c256_61] : memref<32x384xf32, #tpu.memory_space<vmem>>, vector<2x128xf32>
    tpu.vector_store %arg10[%c14, %c256_61], %60 {strides = array<i32>} : memref<32x384xf32, #tpu.memory_space<vmem>>, vector<2x128xf32>,
    %cst_62 = arith.constant 0.000000e+00 : f32
    %62 = vector.broadcast %cst_62 : f32 to vector<2x128xf32>
    %c16_63 = arith.constant 16 : index
    %c0_64 = arith.constant 0 : index
    %63 = vector.load %arg10[%c16_63, %c0_64] : memref<32x384xf32, #tpu.memory_space<vmem>>, vector<2x128xf32>
    tpu.vector_store %arg10[%c16_63, %c0_64], %62 {strides = array<i32>} : memref<32x384xf32, #tpu.memory_space<vmem>>, vector<2x128xf32>,
    %64 = vector.extract_strided_slice %52 {offsets = [16, 0], sizes = [14, 128], strides = [1, 1]} : vector<32x128xf32> to vector<14x128xf32>
    %c18 = arith.constant 18 : index
    %c0_65 = arith.constant 0 : index
    %65 = vector.load %arg10[%c18, %c0_65] : memref<32x384xf32, #tpu.memory_space<vmem>>, vector<14x128xf32>
    tpu.vector_store %arg10[%c18, %c0_65], %64 {strides = array<i32>} : memref<32x384xf32, #tpu.memory_space<vmem>>, vector<14x128xf32>,
    %66 = vector.extract_strided_slice %52 {offsets = [18, 0], sizes = [14, 128], strides = [1, 1]} : vector<32x128xf32> to vector<14x128xf32>
    %c16_66 = arith.constant 16 : index
    %c256_67 = arith.constant 256 : index
    %67 = vector.load %arg10[%c16_66, %c256_67] : memref<32x384xf32, #tpu.memory_space<vmem>>, vector<14x128xf32>
    tpu.vector_store %arg10[%c16_66, %c256_67], %66 {strides = array<i32>} : memref<32x384xf32, #tpu.memory_space<vmem>>, vector<14x128xf32>,
    %cst_68 = arith.constant 0.000000e+00 : f32
    %68 = vector.broadcast %cst_68 : f32 to vector<2x128xf32>
    %c30 = arith.constant 30 : index
    %c256_69 = arith.constant 256 : index
    %69 = vector.load %arg10[%c30, %c256_69] : memref<32x384xf32, #tpu.memory_space<vmem>>, vector<2x128xf32>
    tpu.vector_store %arg10[%c30, %c256_69], %68 {strides = array<i32>} : memref<32x384xf32, #tpu.memory_space<vmem>>, vector<2x128xf32>,
    %c0_70 = arith.constant 0 : index
    %c0_71 = arith.constant 0 : index
    %70 = vector.load %arg10[%c0_70, %c0_71] : memref<32x384xf32, #tpu.memory_space<vmem>>, vector<32x384xf32>
    %c0_72 = arith.constant 0 : index
    %c0_73 = arith.constant 0 : index
    %71 = vector.load %arg6[%c0_72, %c0_73] : memref<384x128xf32, #tpu.memory_space<vmem>>, vector<384x128xf32>
    %cst_74 = arith.constant dense<0.000000e+00> : vector<32x128xf32>
    %72 = tpu.matmul %70, %71, %cst_74 {dimension_numbers = #tpu.dot_dimension_numbers<[1], [0], [0], [1], [0, 0, 1, 1], [], []>} : vector<32x384xf32>, vector<384x128xf32>, vector<32x128xf32> -> vector<32x128xf32>
    %c0_75 = arith.constant 0 : index
    %c0_76 = arith.constant 0 : index
    %73 = vector.load %arg7[%c0_75, %c0_76] : memref<1x128xf32, #tpu.memory_space<vmem>>, vector<1x128xf32>
    %74 = vector.broadcast %73 : vector<1x128xf32> to vector<32x128xf32>
    %75 = arith.addf %72, %74 : vector<32x128xf32>
    %cst_77 = arith.constant 0.000000e+00 : f32
    %76 = vector.broadcast %cst_77 : f32 to vector<32x128xf32>
    %77 = arith.maximumf %75, %76 : vector<32x128xf32>
    %78 = arith.addf %77, %27 : vector<32x128xf32>
    %c0_78 = arith.constant 0 : index
    %c0_79 = arith.constant 0 : index
    %79 = vector.load %arg8[%c0_78, %c0_79] : memref<32x128xf32, #tpu.memory_space<vmem>>, vector<32x128xf32>
    tpu.vector_store %arg8[%c0_78, %c0_79], %78 {strides = array<i32>} : memref<32x128xf32, #tpu.memory_space<vmem>>, vector<32x128xf32>,
    return
  }
  func.func @transform_0(%arg0: i32) -> (i32, i32) {
    %c0_i32 = arith.constant 0 : i32
    %c0_i32_0 = arith.constant 0 : i32
    return %arg0, %c0_i32 : i32, i32
  }
  func.func @transform_1(%arg0: i32) -> (i32, i32) {
    %c0_i32 = arith.constant 0 : i32
    %c0_i32_0 = arith.constant 0 : i32
    %c0_i32_1 = arith.constant 0 : i32
    return %c0_i32, %c0_i32_0 : i32, i32
  }
  func.func @transform_2(%arg0: i32) -> (i32, i32) {
    %c0_i32 = arith.constant 0 : i32
    %c0_i32_0 = arith.constant 0 : i32
    %c0_i32_1 = arith.constant 0 : i32
    return %c0_i32, %c0_i32_0 : i32, i32
  }
  func.func @transform_3(%arg0: i32) -> (i32, i32) {
    %c0_i32 = arith.constant 0 : i32
    %c0_i32_0 = arith.constant 0 : i32
    %c0_i32_1 = arith.constant 0 : i32
    return %c0_i32, %c0_i32_0 : i32, i32
  }
  func.func @transform_4(%arg0: i32) -> (i32, i32) {
    %c0_i32 = arith.constant 0 : i32
    %c0_i32_0 = arith.constant 0 : i32
    %c0_i32_1 = arith.constant 0 : i32
    return %c0_i32, %c0_i32_0 : i32, i32
  }
  func.func @transform_5(%arg0: i32) -> (i32, i32) {
    %c0_i32 = arith.constant 0 : i32
    %c0_i32_0 = arith.constant 0 : i32
    %c0_i32_1 = arith.constant 0 : i32
    return %c0_i32, %c0_i32_0 : i32, i32
  }
  func.func @transform_6(%arg0: i32) -> (i32, i32) {
    %c0_i32 = arith.constant 0 : i32
    %c0_i32_0 = arith.constant 0 : i32
    %c0_i32_1 = arith.constant 0 : i32
    return %c0_i32, %c0_i32_0 : i32, i32
  }
  func.func @transform_7(%arg0: i32) -> (i32, i32) {
    %c0_i32 = arith.constant 0 : i32
    %c0_i32_0 = arith.constant 0 : i32
    return %arg0, %c0_i32 : i32, i32
  }
}

</mosaic_0001>

<llo_original>
// kernel: skip_connection02_forward.1
$region0: #{skip_connection02_forward.1}
  #allocation0 [shape = 'u32[]', space=smem, size = 0x4, offset = 0x4, fixed_abs, tag = 'smem constant byte address 0x4 - core index']
  #allocation1 [shape = 'u32[72,128]{1,0:T(1,128)}', space=vmem, size = 0x9000, scoped, tag = 'internal scratch']
  #allocation2 [shape = 'f32[32,192]{1,0:T(8,128)}', space=vmem, size = 0x8000, scoped, tag = 'scratch operand']
  #allocation3 [shape = 'f32[32,384]{1,0:T(8,128)}', space=vmem, size = 0xc000, scoped, tag = 'scratch operand']
  %s0 = inlined_call_operand.vmem [shape: f32[32,64], index: 0, kind: input, shape index: {}]
  %s1 = inlined_call_operand.vmem [shape: f32[192,256], index: 1, kind: input, shape index: {}]
  %s2 = inlined_call_operand.vmem [shape: f32[1,256], index: 2, kind: input, shape index: {}]
  %s3 = inlined_call_operand.hbm [shape: f32[384,128], index: 3, kind: input, shape index: {}]
  %s4 = inlined_call_operand.vmem [shape: f32[1,128], index: 4, kind: input, shape index: {}]
  %s5 = inlined_call_operand.hbm [shape: f32[384,128], index: 5, kind: input, shape index: {}]
  %s6 = inlined_call_operand.vmem [shape: f32[1,128], index: 6, kind: input, shape index: {}]
  %s7 = inlined_call_operand.vmem [shape: f32[32,128], index: 7, kind: output, shape index: {}]
  %s8 = sld [smem:[#allocation0]]
  $region46: #{skip_connection02_forward.1} parent=0
    _
  %s10 = ssub.s32 1, %s8
  %s11 = scalar_select 0, %s10, %s8
  $region1: #{skip_connection02_forward.1} parent=0
    #allocation4 [shape = 'u8[196608]{0}', space=vmem, size = 0x30000, scoped, tag = 'input window, operand 3, single buffered']
    #allocation5 [shape = 's32[1]{0}', space=sflag, size = 0x4, scoped, tag = 'scoped memory for skip_connection02_forward.1']
    #allocation6 [shape = 'u8[196608]{0}', space=vmem, size = 0x30000, scoped, tag = 'input window, operand 5, single buffered']
    #allocation7 [shape = 's32[1]{0}', space=sflag, size = 0x4, scoped, tag = 'scoped memory for skip_connection02_forward.1']
    %12 = vsyncpa [#allocation5], 0
    %13 = vsyncpa [#allocation7], 0
    // Predicated region
    $region2: #{skip_connection02_forward.1} parent=1 // pred_check
      _
    $region3: #{skip_connection02_forward.1} parent=1 // pred_check_branch
      %15 = sbr.rel (0) target = $region5
    $region4: #{skip_connection02_forward.1} parent=1 // pred_region
      _
    $region5: #{skip_connection02_forward.1} parent=1 // pred_fallthru
      _
    // Predicated region
    $region6: #{skip_connection02_forward.1} parent=1 // pred_check
      _
    $region7: #{skip_connection02_forward.1} parent=1 // pred_check_branch
      %17 = sbr.rel (0) target = $region9
    $region8: #{skip_connection02_forward.1} parent=1 // pred_region
      _
    $region9: #{skip_connection02_forward.1} parent=1 // pred_fallthru
      _
    // Predicated region
    $region10: #{skip_connection02_forward.1} parent=1 // pred_check
      _
    $region11: #{skip_connection02_forward.1} parent=1 // pred_check_branch
      %19 = sbr.rel (0) target = $region13
    $region12: #{skip_connection02_forward.1} parent=1 // pred_region
      _
    $region13: #{skip_connection02_forward.1} parent=1 // pred_fallthru
      _
    // Predicated region
    $region14: #{skip_connection02_forward.1} parent=1 // pred_check
      _
    $region15: #{skip_connection02_forward.1} parent=1 // pred_check_branch
      %21 = sbr.rel (0) target = $region17
    $region16: #{skip_connection02_forward.1} parent=1 // pred_region
      %23 = vsyncadd [#allocation5], 0
      %s24 = sshll.u32 %s3, 4
      %s25 = int_to_ptr.hbm [resolvable:$true] %s24
      %s26 = sshll.u32 [#allocation4], 4
      %s27 = int_to_ptr.vmem [resolvable:$true] %s26
      %32 = dma.hbm_to_vmem [thread:$0]  %s25, 6144, %s27, [#allocation5], 128, 128, 8
    $region17: #{skip_connection02_forward.1} parent=1 // pred_fallthru
      _
    // Predicated region
    $region18: #{skip_connection02_forward.1} parent=1 // pred_check
      _
    $region19: #{skip_connection02_forward.1} parent=1 // pred_check_branch
      %34 = sbr.rel (0) target = $region21
    $region20: #{skip_connection02_forward.1} parent=1 // pred_region
      _
    $region21: #{skip_connection02_forward.1} parent=1 // pred_fallthru
      _
    // Predicated region
    $region22: #{skip_connection02_forward.1} parent=1 // pred_check
      _
    $region23: #{skip_connection02_forward.1} parent=1 // pred_check_branch
      %36 = sbr.rel (0) target = $region25
    $region24: #{skip_connection02_forward.1} parent=1 // pred_region
      %38 = vsyncadd [#allocation7], 0
      %s39 = sshll.u32 %s5, 4
      %s40 = int_to_ptr.hbm [resolvable:$true] %s39
      %s41 = sshll.u32 [#allocation6], 4
      %s42 = int_to_ptr.vmem [resolvable:$true] %s41
      %47 = dma.hbm_to_vmem [thread:$0]  %s40, 6144, %s42, [#allocation7], 128, 128, 8
    $region25: #{skip_connection02_forward.1} parent=1 // pred_fallthru
      _
    // Predicated region
    $region26: #{skip_connection02_forward.1} parent=1 // pred_check
      _
    $region27: #{skip_connection02_forward.1} parent=1 // pred_check_branch
      %49 = sbr.rel (0) target = $region29
    $region28: #{skip_connection02_forward.1} parent=1 // pred_region
      _
    $region29: #{skip_connection02_forward.1} parent=1 // pred_fallthru
      _
    // Predicated region
    $region30: #{skip_connection02_forward.1} parent=1 // pred_check
      _
    $region31: #{skip_connection02_forward.1} parent=1 // pred_check_branch
      %51 = sbr.rel (0) target = $region33
    $region32: #{skip_connection02_forward.1} parent=1 // pred_region
      %53 = dma.done [#allocation5], 6144
    $region33: #{skip_connection02_forward.1} parent=1 // pred_fallthru
      _
    // Predicated region
    $region34: #{skip_connection02_forward.1} parent=1 // pred_check
      _
    $region35: #{skip_connection02_forward.1} parent=1 // pred_check_branch
      %55 = sbr.rel (0) target = $region37
    $region36: #{skip_connection02_forward.1} parent=1 // pred_region
      %57 = dma.done [#allocation7], 6144
    $region37: #{skip_connection02_forward.1} parent=1 // pred_fallthru
      _
    %v58 = vld [vmem:[%s0] sm:$0xff]
    %v59 = vld [vmem:[%s0 + $0x8] sm:$0xff]
    %v60 = vld [vmem:[%s0 + $0x10] sm:$0xff]
    %v61 = vld [vmem:[%s0 + $0x18] sm:$0xff]
    %66 = vrot.lane.b32.xlu0 %v58, 64
    %v67 = vpop.permute.xlu0 %66
    %68 = vrot.lane.b32.xlu0 %v59, 64
    %v69 = vpop.permute.xlu0 %68
    %70 = vrot.lane.b32.xlu0 %v60, 64
    %v71 = vpop.permute.xlu0 %70
    %72 = vrot.lane.b32.xlu0 %v61, 64
    %v73 = vpop.permute.xlu0 %72
    %vm78 = vcmask 1048064
    %79 = vst.msk [vmem:[#allocation2] sm:$0xff] %vm78, %v67
    %80 = vst.msk [vmem:[#allocation2 + $0x10] sm:$0xff] %vm78, %v69
    %81 = vst.msk [vmem:[#allocation2 + $0x20] sm:$0xff] %vm78, %v71
    %82 = vst.msk [vmem:[#allocation2 + $0x30] sm:$0xff] %vm78, %v73
    %vm83 = vcmask 516096
    %84 = vst.msk [vmem:[#allocation2] sm:$0x1] %vm83, 0.0
    %vm85 = vcmask 1040384
    %v86 = vrot.slane %v58, 7
    %v87 = vrot.slane %v59, 7
    %v88 = vsel %vm85, %v86, %v87
    %vm91 = vcmask 523265
    %92 = vst.msk [vmem:[#allocation2] sm:$0xfe] %vm91, %v86
    %vm93 = vcmask 523264
    %94 = vst.msk [vmem:[#allocation2 + $0x10] sm:$0xff] %vm93, %v88
    %vm95 = vcmask 1046528
    %v96 = vrot.slane %v58, 1
    %v97 = vrot.slane %v59, 1
    %v98 = vsel %vm95, %v96, %v97
    %101 = vst.msk [vmem:[#allocation2 + $0x8] sm:$0xff] %vm93, %v98
    %vm102 = vcmask 522240
    %103 = vst.msk [vmem:[#allocation2 + $0x18] sm:$0x7f] %vm102, %v97
    %104 = vst.msk [vmem:[#allocation2 + $0x1f] sm:$0x1] %vm83, 0.0
    %105 = vst.msk [vmem:[#allocation2 + $0x20] sm:$0x1] %vm83, 0.0
    %v106 = vrot.slane %v60, 7
    %v107 = vrot.slane %v61, 7
    %v108 = vsel %vm85, %v106, %v107
    %111 = vst.msk [vmem:[#allocation2 + $0x20] sm:$0xfe] %vm91, %v106
    %112 = vst.msk [vmem:[#allocation2 + $0x30] sm:$0xff] %vm93, %v108
    %v113 = vrot.slane %v60, 1
    %v114 = vrot.slane %v61, 1
    %v115 = vsel %vm95, %v113, %v114
    %118 = vst.msk [vmem:[#allocation2 + $0x28] sm:$0xff] %vm93, %v115
    %119 = vst.msk [vmem:[#allocation2 + $0x38] sm:$0x7f] %vm102, %v114
    %120 = vst.msk [vmem:[#allocation2 + $0x3f] sm:$0x1] %vm83, 0.0
    %v121 = vld [vmem:[#allocation2] sm:$0xff]
    %v122 = vld [vmem:[#allocation2 + $0x8] sm:$0xff]
    %v123 = vld [vmem:[#allocation2 + $0x10] sm:$0xff]
    %v124 = vld [vmem:[#allocation2 + $0x18] sm:$0xff]
    %v125 = vld [vmem:[#allocation2 + $0x20] sm:$0xff]
    %v126 = vld [vmem:[#allocation2 + $0x28] sm:$0xff]
    %v127 = vld [vmem:[#allocation2 + $0x30] sm:$0xff]
    %v128 = vld [vmem:[#allocation2 + $0x38] sm:$0xff]
    %v129 = vld [vmem:[%s1] sm:$0xff]
    %v130 = vld [vmem:[%s1 + $0x8] sm:$0xff]
    %v131 = vld [vmem:[%s1 + $0x10] sm:$0xff]
    %v132 = vld [vmem:[%s1 + $0x18] sm:$0xff]
    %v133 = vld [vmem:[%s1 + $0x20] sm:$0xff]
    %v134 = vld [vmem:[%s1 + $0x28] sm:$0xff]
    %v135 = vld [vmem:[%s1 + $0x30] sm:$0xff]
    %v136 = vld [vmem:[%s1 + $0x38] sm:$0xff]
    %v137 = vld [vmem:[%s1 + $0x40] sm:$0xff]
    %v138 = vld [vmem:[%s1 + $0x48] sm:$0xff]
    %v139 = vld [vmem:[%s1 + $0x50] sm:$0xff]
    %v140 = vld [vmem:[%s1 + $0x58] sm:$0xff]
    %v141 = vld [vmem:[%s1 + $0x60] sm:$0xff]
    %v142 = vld [vmem:[%s1 + $0x68] sm:$0xff]
    %v143 = vld [vmem:[%s1 + $0x70] sm:$0xff]
    %v144 = vld [vmem:[%s1 + $0x78] sm:$0xff]
    %v145 = vld [vmem:[%s1 + $0x80] sm:$0xff]
    %v146 = vld [vmem:[%s1 + $0x88] sm:$0xff]
    %v147 = vld [vmem:[%s1 + $0x90] sm:$0xff]
    %v148 = vld [vmem:[%s1 + $0x98] sm:$0xff]
    %v149 = vld [vmem:[%s1 + $0xa0] sm:$0xff]
    %v150 = vld [vmem:[%s1 + $0xa8] sm:$0xff]
    %v151 = vld [vmem:[%s1 + $0xb0] sm:$0xff]
    %v152 = vld [vmem:[%s1 + $0xb8] sm:$0xff]
    %v153 = vld [vmem:[%s1 + $0xc0] sm:$0xff]
    %v154 = vld [vmem:[%s1 + $0xc8] sm:$0xff]
    %v155 = vld [vmem:[%s1 + $0xd0] sm:$0xff]
    %v156 = vld [vmem:[%s1 + $0xd8] sm:$0xff]
    %v157 = vld [vmem:[%s1 + $0xe0] sm:$0xff]
    %v158 = vld [vmem:[%s1 + $0xe8] sm:$0xff]
    %v159 = vld [vmem:[%s1 + $0xf0] sm:$0xff]
    %v160 = vld [vmem:[%s1 + $0xf8] sm:$0xff]
    %v161 = vld [vmem:[%s1 + $0x100] sm:$0xff]
    %v162 = vld [vmem:[%s1 + $0x108] sm:$0xff]
    %v163 = vld [vmem:[%s1 + $0x110] sm:$0xff]
    %v164 = vld [vmem:[%s1 + $0x118] sm:$0xff]
    %v165 = vld [vmem:[%s1 + $0x120] sm:$0xff]
    %v166 = vld [vmem:[%s1 + $0x128] sm:$0xff]
    %v167 = vld [vmem:[%s1 + $0x130] sm:$0xff]
    %v168 = vld [vmem:[%s1 + $0x138] sm:$0xff]
    %v169 = vld [vmem:[%s1 + $0x140] sm:$0xff]
    %v170 = vld [vmem:[%s1 + $0x148] sm:$0xff]
    %v171 = vld [vmem:[%s1 + $0x150] sm:$0xff]
    %v172 = vld [vmem:[%s1 + $0x158] sm:$0xff]
    %v173 = vld [vmem:[%s1 + $0x160] sm:$0xff]
    %v174 = vld [vmem:[%s1 + $0x168] sm:$0xff]
    %v175 = vld [vmem:[%s1 + $0x170] sm:$0xff]
    %v176 = vld [vmem:[%s1 + $0x178] sm:$0xff]
    %v177 = vld [vmem:[%s2] sm:$0x3]
    %v179 = vperm.slane %v177, 0
    %v180 = vperm.slane %v177, 1
    %v184 = vsel %vm93, %v122, 0
    %v187 = vsel %vm93, %v124, 0
    %v190 = vsel %vm93, %v126, 0
    %v193 = vsel %vm93, %v128, 0
    %195 = vmatpush.msra.mxu0 %v159
    %196 = vmatpush.msra.mxu0 %v157
    %197 = vmatpush.msra.mxu0 %v155
    %198 = vmatpush.msra.mxu0 %v153
    %199 = vmatpush.msra.mxu0 %v151
    %200 = vmatpush.msra.mxu0 %v149
    %201 = vmatpush.msra.mxu0 %v147
    %202 = vmatpush.msra.mxu0 %v145
    %203 = vmatpush.msra.mxu0 %v143
    %204 = vmatpush.msra.mxu0 %v141
    %205 = vmatpush.msra.mxu0 %v139
    %206 = vmatpush.msra.mxu0 %v137
    %207 = vmatpush.msra.mxu0 %v135
    %208 = vmatpush.msra.mxu0 %v133
    %209 = vmatpush.msra.mxu0 %v131
    %210 = vmatpush.msra.mxu0 %v129
    %211 = vmatmul.f32.gmra.mxu0 %v121
    %v212 = vpop.f32.mrf.mxu0
    %v213 = vadd.f32 %v179, %v212
    %214 = vmatmul.f32.gmra.mxu0 %v123
    %v215 = vpop.f32.mrf.mxu0
    %v216 = vadd.f32 %v179, %v215
    %217 = vmatmul.f32.gmra.mxu0 %v125
    %v218 = vpop.f32.mrf.mxu0
    %v219 = vadd.f32 %v179, %v218
    %220 = vmatmul.f32.gmra.mxu0 %v127
    %v221 = vpop.f32.mrf.mxu0
    %v222 = vadd.f32 %v179, %v221
    %223 = vdwg.mxu0
    %224 = vmatpush.msra.mxu0 0.0
    %225 = vmatpush.msra.mxu0 0.0
    %226 = vmatpush.msra.mxu0 0.0
    %227 = vmatpush.msra.mxu0 0.0
    %228 = vmatpush.msra.mxu0 0.0
    %229 = vmatpush.msra.mxu0 0.0
    %230 = vmatpush.msra.mxu0 0.0
    %231 = vmatpush.msra.mxu0 0.0
    %232 = vmatpush.msra.mxu0 %v175
    %233 = vmatpush.msra.mxu0 %v173
    %234 = vmatpush.msra.mxu0 %v171
    %235 = vmatpush.msra.mxu0 %v169
    %236 = vmatpush.msra.mxu0 %v167
    %237 = vmatpush.msra.mxu0 %v165
    %238 = vmatpush.msra.mxu0 %v163
    %239 = vmatpush.msra.mxu0 %v161
    %240 = vmatmul.f32.gmra.mxu0 %v184
    %v241 = vpop.f32.mrf.mxu0
    %v242 = vadd.f32 %v213, %v241
    %243 = vmatmul.f32.gmra.mxu0 %v187
    %v244 = vpop.f32.mrf.mxu0
    %v245 = vadd.f32 %v216, %v244
    %246 = vmatmul.f32.gmra.mxu0 %v190
    %v247 = vpop.f32.mrf.mxu0
    %v248 = vadd.f32 %v219, %v247
    %249 = vmatmul.f32.gmra.mxu0 %v193
    %v250 = vpop.f32.mrf.mxu0
    %v251 = vadd.f32 %v222, %v250
    %252 = vdwg.mxu0
    %253 = vmatpush.msra.mxu0 %v160
    %254 = vmatpush.msra.mxu0 %v158
    %255 = vmatpush.msra.mxu0 %v156
    %256 = vmatpush.msra.mxu0 %v154
    %257 = vmatpush.msra.mxu0 %v152
    %258 = vmatpush.msra.mxu0 %v150
    %259 = vmatpush.msra.mxu0 %v148
    %260 = vmatpush.msra.mxu0 %v146
    %261 = vmatpush.msra.mxu0 %v144
    %262 = vmatpush.msra.mxu0 %v142
    %263 = vmatpush.msra.mxu0 %v140
    %264 = vmatpush.msra.mxu0 %v138
    %265 = vmatpush.msra.mxu0 %v136
    %266 = vmatpush.msra.mxu0 %v134
    %267 = vmatpush.msra.mxu0 %v132
    %268 = vmatpush.msra.mxu0 %v130
    %269 = vmatmul.f32.gmra.mxu0 %v121
    %v270 = vpop.f32.mrf.mxu0
    %v271 = vadd.f32 %v180, %v270
    %272 = vmatmul.f32.gmra.mxu0 %v123
    %v273 = vpop.f32.mrf.mxu0
    %v274 = vadd.f32 %v180, %v273
    %275 = vmatmul.f32.gmra.mxu0 %v125
    %v276 = vpop.f32.mrf.mxu0
    %v277 = vadd.f32 %v180, %v276
    %278 = vmatmul.f32.gmra.mxu0 %v127
    %v279 = vpop.f32.mrf.mxu0
    %v280 = vadd.f32 %v180, %v279
    %281 = vdwg.mxu0
    %282 = vmatpush.msra.mxu0 0.0
    %283 = vmatpush.msra.mxu0 0.0
    %284 = vmatpush.msra.mxu0 0.0
    %285 = vmatpush.msra.mxu0 0.0
    %286 = vmatpush.msra.mxu0 0.0
    %287 = vmatpush.msra.mxu0 0.0
    %288 = vmatpush.msra.mxu0 0.0
    %289 = vmatpush.msra.mxu0 0.0
    %290 = vmatpush.msra.mxu0 %v176
    %291 = vmatpush.msra.mxu0 %v174
    %292 = vmatpush.msra.mxu0 %v172
    %293 = vmatpush.msra.mxu0 %v170
    %294 = vmatpush.msra.mxu0 %v168
    %295 = vmatpush.msra.mxu0 %v166
    %296 = vmatpush.msra.mxu0 %v164
    %297 = vmatpush.msra.mxu0 %v162
    %298 = vmatmul.f32.gmra.mxu0 %v184
    %v299 = vpop.f32.mrf.mxu0
    %v300 = vadd.f32 %v271, %v299
    %301 = vmatmul.f32.gmra.mxu0 %v187
    %v302 = vpop.f32.mrf.mxu0
    %v303 = vadd.f32 %v274, %v302
    %304 = vmatmul.f32.gmra.mxu0 %v190
    %v305 = vpop.f32.mrf.mxu0
    %v306 = vadd.f32 %v277, %v305
    %307 = vmatmul.f32.gmra.mxu0 %v193
    %v308 = vpop.f32.mrf.mxu0
    %v309 = vadd.f32 %v280, %v308
    %310 = vdwg.mxu0
    %v311 = vmax.f32 %v242, 0.0
    %v312 = vmax.f32 %v300, 0.0
    %v313 = vmax.f32 %v245, 0.0
    %v314 = vmax.f32 %v303, 0.0
    %v315 = vmax.f32 %v248, 0.0
    %v316 = vmax.f32 %v306, 0.0
    %v317 = vmax.f32 %v251, 0.0
    %v318 = vmax.f32 %v309, 0.0
    %319 = vst [vmem:[#allocation3 + $0x8] sm:$0xff] %v311
    %320 = vst [vmem:[#allocation3 + $0x20] sm:$0xff] %v313
    %321 = vst [vmem:[#allocation3 + $0x38] sm:$0xff] %v315
    %322 = vst [vmem:[#allocation3 + $0x50] sm:$0xff] %v317
    %323 = vst [vmem:[#allocation3] sm:$0x1] 0.0
    %v326 = vrot.slane %v311, 7
    %v327 = vrot.slane %v313, 7
    %v328 = vsel %vm85, %v326, %v327
    %331 = vst [vmem:[#allocation3] sm:$0xfe] %v326
    %332 = vst [vmem:[#allocation3 + $0x18] sm:$0xff] %v328
    %v333 = vrot.slane %v311, 1
    %v334 = vrot.slane %v313, 1
    %v335 = vsel %vm95, %v333, %v334
    %338 = vst [vmem:[#allocation3 + $0x10] sm:$0xff] %v335
    %339 = vst [vmem:[#allocation3 + $0x28] sm:$0x7f] %v334
    %340 = vst [vmem:[#allocation3 + $0x2f] sm:$0x1] 0.0
    %341 = vst [vmem:[#allocation3 + $0x30] sm:$0x1] 0.0
    %v344 = vrot.slane %v315, 7
    %v345 = vrot.slane %v317, 7
    %v346 = vsel %vm85, %v344, %v345
    %349 = vst [vmem:[#allocation3 + $0x30] sm:$0xfe] %v344
    %350 = vst [vmem:[#allocation3 + $0x48] sm:$0xff] %v346
    %v351 = vrot.slane %v315, 1
    %v352 = vrot.slane %v317, 1
    %v353 = vsel %vm95, %v351, %v352
    %356 = vst [vmem:[#allocation3 + $0x40] sm:$0xff] %v353
    %357 = vst [vmem:[#allocation3 + $0x58] sm:$0x7f] %v352
    %358 = vst [vmem:[#allocation3 + $0x5f] sm:$0x1] 0.0
    %v359 = vld [vmem:[#allocation3] sm:$0xff]
    %v360 = vld [vmem:[#allocation3 + $0x8] sm:$0xff]
    %v361 = vld [vmem:[#allocation3 + $0x10] sm:$0xff]
    %v362 = vld [vmem:[#allocation3 + $0x18] sm:$0xff]
    %v363 = vld [vmem:[#allocation3 + $0x20] sm:$0xff]
    %v364 = vld [vmem:[#allocation3 + $0x28] sm:$0xff]
    %v365 = vld [vmem:[#allocation3 + $0x30] sm:$0xff]
    %v366 = vld [vmem:[#allocation3 + $0x38] sm:$0xff]
    %v367 = vld [vmem:[#allocation3 + $0x40] sm:$0xff]
    %v368 = vld [vmem:[#allocation3 + $0x48] sm:$0xff]
    %v369 = vld [vmem:[#allocation3 + $0x50] sm:$0xff]
    %v370 = vld [vmem:[#allocation3 + $0x58] sm:$0xff]
    %v371 = vld [vmem:[#allocation4] sm:$0xff]
    %v372 = vld [vmem:[#allocation4 + $0x8] sm:$0xff]
    %v373 = vld [vmem:[#allocation4 + $0x10] sm:$0xff]
    %v374 = vld [vmem:[#allocation4 + $0x18] sm:$0xff]
    %v375 = vld [vmem:[#allocation4 + $0x20] sm:$0xff]
    %v376 = vld [vmem:[#allocation4 + $0x28] sm:$0xff]
    %v377 = vld [vmem:[#allocation4 + $0x30] sm:$0xff]
    %v378 = vld [vmem:[#allocation4 + $0x38] sm:$0xff]
    %v379 = vld [vmem:[#allocation4 + $0x40] sm:$0xff]
    %v380 = vld [vmem:[#allocation4 + $0x48] sm:$0xff]
    %v381 = vld [vmem:[#allocation4 + $0x50] sm:$0xff]
    %v382 = vld [vmem:[#allocation4 + $0x58] sm:$0xff]
    %v383 = vld [vmem:[#allocation4 + $0x60] sm:$0xff]
    %v384 = vld [vmem:[#allocation4 + $0x68] sm:$0xff]
    %v385 = vld [vmem:[#allocation4 + $0x70] sm:$0xff]
    %v386 = vld [vmem:[#allocation4 + $0x78] sm:$0xff]
    %v387 = vld [vmem:[#allocation4 + $0x80] sm:$0xff]
    %v388 = vld [vmem:[#allocation4 + $0x88] sm:$0xff]
    %v389 = vld [vmem:[#allocation4 + $0x90] sm:$0xff]
    %v390 = vld [vmem:[#allocation4 + $0x98] sm:$0xff]
    %v391 = vld [vmem:[#allocation4 + $0xa0] sm:$0xff]
    %v392 = vld [vmem:[#allocation4 + $0xa8] sm:$0xff]
    %v393 = vld [vmem:[#allocation4 + $0xb0] sm:$0xff]
    %v394 = vld [vmem:[#allocation4 + $0xb8] sm:$0xff]
    %v395 = vld [vmem:[#allocation4 + $0xc0] sm:$0xff]
    %v396 = vld [vmem:[#allocation4 + $0xc8] sm:$0xff]
    %v397 = vld [vmem:[#allocation4 + $0xd0] sm:$0xff]
    %v398 = vld [vmem:[#allocation4 + $0xd8] sm:$0xff]
    %v399 = vld [vmem:[#allocation4 + $0xe0] sm:$0xff]
    %v400 = vld [vmem:[#allocation4 + $0xe8] sm:$0xff]
    %v401 = vld [vmem:[#allocation4 + $0xf0] sm:$0xff]
    %v402 = vld [vmem:[#allocation4 + $0xf8] sm:$0xff]
    %v403 = vld [vmem:[#allocation4 + $0x100] sm:$0xff]
    %v404 = vld [vmem:[#allocation4 + $0x108] sm:$0xff]
    %v405 = vld [vmem:[#allocation4 + $0x110] sm:$0xff]
    %v406 = vld [vmem:[#allocation4 + $0x118] sm:$0xff]
    %v407 = vld [vmem:[#allocation4 + $0x120] sm:$0xff]
    %v408 = vld [vmem:[#allocation4 + $0x128] sm:$0xff]
    %v409 = vld [vmem:[#allocation4 + $0x130] sm:$0xff]
    %v410 = vld [vmem:[#allocation4 + $0x138] sm:$0xff]
    %v411 = vld [vmem:[#allocation4 + $0x140] sm:$0xff]
    %v412 = vld [vmem:[#allocation4 + $0x148] sm:$0xff]
    %v413 = vld [vmem:[#allocation4 + $0x150] sm:$0xff]
    %v414 = vld [vmem:[#allocation4 + $0x158] sm:$0xff]
    %v415 = vld [vmem:[#allocation4 + $0x160] sm:$0xff]
    %v416 = vld [vmem:[#allocation4 + $0x168] sm:$0xff]
    %v417 = vld [vmem:[#allocation4 + $0x170] sm:$0xff]
    %v418 = vld [vmem:[#allocation4 + $0x178] sm:$0xff]
    %v419 = vld [vmem:[%s4] sm:$0x1]
    %v421 = vperm.slane %v419, 0
    %423 = vmatpush.msra.mxu0 %v386
    %424 = vmatpush.msra.mxu0 %v385
    %425 = vmatpush.msra.mxu0 %v384
    %426 = vmatpush.msra.mxu0 %v383
    %427 = vmatpush.msra.mxu0 %v382
    %428 = vmatpush.msra.mxu0 %v381
    %429 = vmatpush.msra.mxu0 %v380
    %430 = vmatpush.msra.mxu0 %v379
    %431 = vmatpush.msra.mxu0 %v378
    %432 = vmatpush.msra.mxu0 %v377
    %433 = vmatpush.msra.mxu0 %v376
    %434 = vmatpush.msra.mxu0 %v375
    %435 = vmatpush.msra.mxu0 %v374
    %436 = vmatpush.msra.mxu0 %v373
    %437 = vmatpush.msra.mxu0 %v372
    %438 = vmatpush.msra.mxu0 %v371
    %439 = vmatmul.f32.gmra.mxu0 %v359
    %v440 = vpop.f32.mrf.mxu0
    %v441 = vadd.f32 %v421, %v440
    %442 = vmatmul.f32.gmra.mxu0 %v362
    %v443 = vpop.f32.mrf.mxu0
    %v444 = vadd.f32 %v421, %v443
    %445 = vmatmul.f32.gmra.mxu0 %v365
    %v446 = vpop.f32.mrf.mxu0
    %v447 = vadd.f32 %v421, %v446
    %448 = vmatmul.f32.gmra.mxu0 %v368
    %v449 = vpop.f32.mrf.mxu0
    %v450 = vadd.f32 %v421, %v449
    %451 = vdwg.mxu0
    %452 = vmatpush.msra.mxu0 %v402
    %453 = vmatpush.msra.mxu0 %v401
    %454 = vmatpush.msra.mxu0 %v400
    %455 = vmatpush.msra.mxu0 %v399
    %456 = vmatpush.msra.mxu0 %v398
    %457 = vmatpush.msra.mxu0 %v397
    %458 = vmatpush.msra.mxu0 %v396
    %459 = vmatpush.msra.mxu0 %v395
    %460 = vmatpush.msra.mxu0 %v394
    %461 = vmatpush.msra.mxu0 %v393
    %462 = vmatpush.msra.mxu0 %v392
    %463 = vmatpush.msra.mxu0 %v391
    %464 = vmatpush.msra.mxu0 %v390
    %465 = vmatpush.msra.mxu0 %v389
    %466 = vmatpush.msra.mxu0 %v388
    %467 = vmatpush.msra.mxu0 %v387
    %468 = vmatmul.f32.gmra.mxu0 %v360
    %v469 = vpop.f32.mrf.mxu0
    %v470 = vadd.f32 %v441, %v469
    %471 = vmatmul.f32.gmra.mxu0 %v363
    %v472 = vpop.f32.mrf.mxu0
    %v473 = vadd.f32 %v444, %v472
    %474 = vmatmul.f32.gmra.mxu0 %v366
    %v475 = vpop.f32.mrf.mxu0
    %v476 = vadd.f32 %v447, %v475
    %477 = vmatmul.f32.gmra.mxu0 %v369
    %v478 = vpop.f32.mrf.mxu0
    %v479 = vadd.f32 %v450, %v478
    %480 = vdwg.mxu0
    %481 = vmatpush.msra.mxu0 %v418
    %482 = vmatpush.msra.mxu0 %v417
    %483 = vmatpush.msra.mxu0 %v416
    %484 = vmatpush.msra.mxu0 %v415
    %485 = vmatpush.msra.mxu0 %v414
    %486 = vmatpush.msra.mxu0 %v413
    %487 = vmatpush.msra.mxu0 %v412
    %488 = vmatpush.msra.mxu0 %v411
    %489 = vmatpush.msra.mxu0 %v410
    %490 = vmatpush.msra.mxu0 %v409
    %491 = vmatpush.msra.mxu0 %v408
    %492 = vmatpush.msra.mxu0 %v407
    %493 = vmatpush.msra.mxu0 %v406
    %494 = vmatpush.msra.mxu0 %v405
    %495 = vmatpush.msra.mxu0 %v404
    %496 = vmatpush.msra.mxu0 %v403
    %497 = vmatmul.f32.gmra.mxu0 %v361
    %v498 = vpop.f32.mrf.mxu0
    %v499 = vadd.f32 %v470, %v498
    %500 = vmatmul.f32.gmra.mxu0 %v364
    %v501 = vpop.f32.mrf.mxu0
    %v502 = vadd.f32 %v473, %v501
    %503 = vmatmul.f32.gmra.mxu0 %v367
    %v504 = vpop.f32.mrf.mxu0
    %v505 = vadd.f32 %v476, %v504
    %506 = vmatmul.f32.gmra.mxu0 %v370
    %v507 = vpop.f32.mrf.mxu0
    %v508 = vadd.f32 %v479, %v507
    %509 = vdwg.mxu0
    %v510 = vmax.f32 %v499, 0.0
    %v511 = vmax.f32 %v502, 0.0
    %v512 = vmax.f32 %v505, 0.0
    %v513 = vmax.f32 %v508, 0.0
    %514 = vst [vmem:[#allocation3 + $0x8] sm:$0xff] %v510
    %515 = vst [vmem:[#allocation3 + $0x20] sm:$0xff] %v511
    %516 = vst [vmem:[#allocation3 + $0x38] sm:$0xff] %v512
    %517 = vst [vmem:[#allocation3 + $0x50] sm:$0xff] %v513
    %518 = vst [vmem:[#allocation3] sm:$0x3] 0.0
    %vm521 = vcmask 1041408
    %v522 = vrot.slane %v510, 6
    %v523 = vrot.slane %v511, 6
    %v524 = vsel %vm521, %v522, %v523
    %527 = vst [vmem:[#allocation3] sm:$0xfc] %v522
    %528 = vst [vmem:[#allocation3 + $0x18] sm:$0xff] %v524
    %vm529 = vcmask 1045504
    %v530 = vrot.slane %v510, 2
    %v531 = vrot.slane %v511, 2
    %v532 = vsel %vm529, %v530, %v531
    %535 = vst [vmem:[#allocation3 + $0x10] sm:$0xff] %v532
    %536 = vst [vmem:[#allocation3 + $0x28] sm:$0x3f] %v531
    %537 = vst [vmem:[#allocation3 + $0x28] sm:$0xc0] 0.0
    %538 = vst [vmem:[#allocation3 + $0x30] sm:$0x3] 0.0
    %v541 = vrot.slane %v512, 6
    %v542 = vrot.slane %v513, 6
    %v543 = vsel %vm521, %v541, %v542
    %546 = vst [vmem:[#allocation3 + $0x30] sm:$0xfc] %v541
    %547 = vst [vmem:[#allocation3 + $0x48] sm:$0xff] %v543
    %v548 = vrot.slane %v512, 2
    %v549 = vrot.slane %v513, 2
    %v550 = vsel %vm529, %v548, %v549
    %553 = vst [vmem:[#allocation3 + $0x40] sm:$0xff] %v550
    %554 = vst [vmem:[#allocation3 + $0x58] sm:$0x3f] %v549
    %555 = vst [vmem:[#allocation3 + $0x58] sm:$0xc0] 0.0
    %v556 = vld [vmem:[#allocation3] sm:$0xff]
    %v557 = vld [vmem:[#allocation3 + $0x8] sm:$0xff]
    %v558 = vld [vmem:[#allocation3 + $0x10] sm:$0xff]
    %v559 = vld [vmem:[#allocation3 + $0x18] sm:$0xff]
    %v560 = vld [vmem:[#allocation3 + $0x20] sm:$0xff]
    %v561 = vld [vmem:[#allocation3 + $0x28] sm:$0xff]
    %v562 = vld [vmem:[#allocation3 + $0x30] sm:$0xff]
    %v563 = vld [vmem:[#allocation3 + $0x38] sm:$0xff]
    %v564 = vld [vmem:[#allocation3 + $0x40] sm:$0xff]
    %v565 = vld [vmem:[#allocation3 + $0x48] sm:$0xff]
    %v566 = vld [vmem:[#allocation3 + $0x50] sm:$0xff]
    %v567 = vld [vmem:[#allocation3 + $0x58] sm:$0xff]
    %v568 = vld [vmem:[#allocation6] sm:$0xff]
    %v569 = vld [vmem:[#allocation6 + $0x8] sm:$0xff]
    %v570 = vld [vmem:[#allocation6 + $0x10] sm:$0xff]
    %v571 = vld [vmem:[#allocation6 + $0x18] sm:$0xff]
    %v572 = vld [vmem:[#allocation6 + $0x20] sm:$0xff]
    %v573 = vld [vmem:[#allocation6 + $0x28] sm:$0xff]
    %v574 = vld [vmem:[#allocation6 + $0x30] sm:$0xff]
    %v575 = vld [vmem:[#allocation6 + $0x38] sm:$0xff]
    %v576 = vld [vmem:[#allocation6 + $0x40] sm:$0xff]
    %v577 = vld [vmem:[#allocation6 + $0x48] sm:$0xff]
    %v578 = vld [vmem:[#allocation6 + $0x50] sm:$0xff]
    %v579 = vld [vmem:[#allocation6 + $0x58] sm:$0xff]
    %v580 = vld [vmem:[#allocation6 + $0x60] sm:$0xff]
    %v581 = vld [vmem:[#allocation6 + $0x68] sm:$0xff]
    %v582 = vld [vmem:[#allocation6 + $0x70] sm:$0xff]
    %v583 = vld [vmem:[#allocation6 + $0x78] sm:$0xff]
    %v584 = vld [vmem:[#allocation6 + $0x80] sm:$0xff]
    %v585 = vld [vmem:[#allocation6 + $0x88] sm:$0xff]
    %v586 = vld [vmem:[#allocation6 + $0x90] sm:$0xff]
    %v587 = vld [vmem:[#allocation6 + $0x98] sm:$0xff]
    %v588 = vld [vmem:[#allocation6 + $0xa0] sm:$0xff]
    %v589 = vld [vmem:[#allocation6 + $0xa8] sm:$0xff]
    %v590 = vld [vmem:[#allocation6 + $0xb0] sm:$0xff]
    %v591 = vld [vmem:[#allocation6 + $0xb8] sm:$0xff]
    %v592 = vld [vmem:[#allocation6 + $0xc0] sm:$0xff]
    %v593 = vld [vmem:[#allocation6 + $0xc8] sm:$0xff]
    %v594 = vld [vmem:[#allocation6 + $0xd0] sm:$0xff]
    %v595 = vld [vmem:[#allocation6 + $0xd8] sm:$0xff]
    %v596 = vld [vmem:[#allocation6 + $0xe0] sm:$0xff]
    %v597 = vld [vmem:[#allocation6 + $0xe8] sm:$0xff]
    %v598 = vld [vmem:[#allocation6 + $0xf0] sm:$0xff]
    %v599 = vld [vmem:[#allocation6 + $0xf8] sm:$0xff]
    %v600 = vld [vmem:[#allocation6 + $0x100] sm:$0xff]
    %v601 = vld [vmem:[#allocation6 + $0x108] sm:$0xff]
    %v602 = vld [vmem:[#allocation6 + $0x110] sm:$0xff]
    %v603 = vld [vmem:[#allocation6 + $0x118] sm:$0xff]
    %v604 = vld [vmem:[#allocation6 + $0x120] sm:$0xff]
    %v605 = vld [vmem:[#allocation6 + $0x128] sm:$0xff]
    %v606 = vld [vmem:[#allocation6 + $0x130] sm:$0xff]
    %v607 = vld [vmem:[#allocation6 + $0x138] sm:$0xff]
    %v608 = vld [vmem:[#allocation6 + $0x140] sm:$0xff]
    %v609 = vld [vmem:[#allocation6 + $0x148] sm:$0xff]
    %v610 = vld [vmem:[#allocation6 + $0x150] sm:$0xff]
    %v611 = vld [vmem:[#allocation6 + $0x158] sm:$0xff]
    %v612 = vld [vmem:[#allocation6 + $0x160] sm:$0xff]
    %v613 = vld [vmem:[#allocation6 + $0x168] sm:$0xff]
    %v614 = vld [vmem:[#allocation6 + $0x170] sm:$0xff]
    %v615 = vld [vmem:[#allocation6 + $0x178] sm:$0xff]
    %v616 = vld [vmem:[%s6] sm:$0x1]
    %v618 = vperm.slane %v616, 0
    %620 = vmatpush.msra.mxu0 %v583
    %621 = vmatpush.msra.mxu0 %v582
    %622 = vmatpush.msra.mxu0 %v581
    %623 = vmatpush.msra.mxu0 %v580
    %624 = vmatpush.msra.mxu0 %v579
    %625 = vmatpush.msra.mxu0 %v578
    %626 = vmatpush.msra.mxu0 %v577
    %627 = vmatpush.msra.mxu0 %v576
    %628 = vmatpush.msra.mxu0 %v575
    %629 = vmatpush.msra.mxu0 %v574
    %630 = vmatpush.msra.mxu0 %v573
    %631 = vmatpush.msra.mxu0 %v572
    %632 = vmatpush.msra.mxu0 %v571
    %633 = vmatpush.msra.mxu0 %v570
    %634 = vmatpush.msra.mxu0 %v569
    %635 = vmatpush.msra.mxu0 %v568
    %636 = vmatmul.f32.gmra.mxu0 %v556
    %v637 = vpop.f32.mrf.mxu0
    %v638 = vadd.f32 %v618, %v637
    %639 = vmatmul.f32.gmra.mxu0 %v559
    %v640 = vpop.f32.mrf.mxu0
    %v641 = vadd.f32 %v618, %v640
    %642 = vmatmul.f32.gmra.mxu0 %v562
    %v643 = vpop.f32.mrf.mxu0
    %v644 = vadd.f32 %v618, %v643
    %645 = vmatmul.f32.gmra.mxu0 %v565
    %v646 = vpop.f32.mrf.mxu0
    %v647 = vadd.f32 %v618, %v646
    %648 = vdwg.mxu0
    %649 = vmatpush.msra.mxu0 %v599
    %650 = vmatpush.msra.mxu0 %v598
    %651 = vmatpush.msra.mxu0 %v597
    %652 = vmatpush.msra.mxu0 %v596
    %653 = vmatpush.msra.mxu0 %v595
    %654 = vmatpush.msra.mxu0 %v594
    %655 = vmatpush.msra.mxu0 %v593
    %656 = vmatpush.msra.mxu0 %v592
    %657 = vmatpush.msra.mxu0 %v591
    %658 = vmatpush.msra.mxu0 %v590
    %659 = vmatpush.msra.mxu0 %v589
    %660 = vmatpush.msra.mxu0 %v588
    %661 = vmatpush.msra.mxu0 %v587
    %662 = vmatpush.msra.mxu0 %v586
    %663 = vmatpush.msra.mxu0 %v585
    %664 = vmatpush.msra.mxu0 %v584
    %665 = vmatmul.f32.gmra.mxu0 %v557
    %v666 = vpop.f32.mrf.mxu0
    %v667 = vadd.f32 %v638, %v666
    %668 = vmatmul.f32.gmra.mxu0 %v560
    %v669 = vpop.f32.mrf.mxu0
    %v670 = vadd.f32 %v641, %v669
    %671 = vmatmul.f32.gmra.mxu0 %v563
    %v672 = vpop.f32.mrf.mxu0
    %v673 = vadd.f32 %v644, %v672
    %674 = vmatmul.f32.gmra.mxu0 %v566
    %v675 = vpop.f32.mrf.mxu0
    %v676 = vadd.f32 %v647, %v675
    %677 = vdwg.mxu0
    %678 = vmatpush.msra.mxu0 %v615
    %679 = vmatpush.msra.mxu0 %v614
    %680 = vmatpush.msra.mxu0 %v613
    %681 = vmatpush.msra.mxu0 %v612
    %682 = vmatpush.msra.mxu0 %v611
    %683 = vmatpush.msra.mxu0 %v610
    %684 = vmatpush.msra.mxu0 %v609
    %685 = vmatpush.msra.mxu0 %v608
    %686 = vmatpush.msra.mxu0 %v607
    %687 = vmatpush.msra.mxu0 %v606
    %688 = vmatpush.msra.mxu0 %v605
    %689 = vmatpush.msra.mxu0 %v604
    %690 = vmatpush.msra.mxu0 %v603
    %691 = vmatpush.msra.mxu0 %v602
    %692 = vmatpush.msra.mxu0 %v601
    %693 = vmatpush.msra.mxu0 %v600
    %694 = vmatmul.f32.gmra.mxu0 %v558
    %v695 = vpop.f32.mrf.mxu0
    %v696 = vadd.f32 %v667, %v695
    %697 = vmatmul.f32.gmra.mxu0 %v561
    %v698 = vpop.f32.mrf.mxu0
    %v699 = vadd.f32 %v670, %v698
    %700 = vmatmul.f32.gmra.mxu0 %v564
    %v701 = vpop.f32.mrf.mxu0
    %v702 = vadd.f32 %v673, %v701
    %703 = vmatmul.f32.gmra.mxu0 %v567
    %v704 = vpop.f32.mrf.mxu0
    %v705 = vadd.f32 %v676, %v704
    %706 = vdwg.mxu0
    %v707 = vmax.f32 %v696, 0.0
    %v708 = vmax.f32 %v699, 0.0
    %v709 = vmax.f32 %v702, 0.0
    %v710 = vmax.f32 %v705, 0.0
    %v711 = vadd.f32 %v707, %v312
    %v712 = vadd.f32 %v708, %v314
    %v713 = vadd.f32 %v709, %v316
    %v714 = vadd.f32 %v710, %v318
    %715 = vst [vmem:[%s7] sm:$0xff] %v711
    %716 = vst [vmem:[%s7 + $0x8] sm:$0xff] %v712
    %717 = vst [vmem:[%s7 + $0x10] sm:$0xff] %v713
    %718 = vst [vmem:[%s7 + $0x18] sm:$0xff] %v714
    // Predicated region
    $region38: #{skip_connection02_forward.1} parent=1 // pred_check
      _
    $region39: #{skip_connection02_forward.1} parent=1 // pred_check_branch
      %720 = sbr.rel (0) target = $region41
    $region40: #{skip_connection02_forward.1} parent=1 // pred_region
      _
    $region41: #{skip_connection02_forward.1} parent=1 // pred_fallthru
      _
    // Predicated region
    $region42: #{skip_connection02_forward.1} parent=1 // pred_check
      _
    $region43: #{skip_connection02_forward.1} parent=1 // pred_check_branch
      %722 = sbr.rel (0) target = $region45
    $region44: #{skip_connection02_forward.1} parent=1 // pred_region
      _
    $region45: #{skip_connection02_forward.1} parent=1 // pred_fallthru
      _
    %723 = vsyncpa [#allocation5], 1
    %724 = vsyncpa [#allocation7], 1

</llo_original>
